<compile_context>
chip_gen: v6e
topology: v6e:2x2x1
jax: 0.10.0
libtpu: 0.0.40
codegen_flags: <defaults>
</compile_context>

<pallas_src>
import functools

import jax
import jax.numpy as jnp
from jax.experimental import pallas as pl
from jax.experimental.pallas import tpu as pltpu

_C1 = 0.01 ** 2
_C2 = 0.03 ** 2


# ----------------------- Gaussian banded (Toeplitz) matrix -----------------------

def _gauss_band_matrix(n, window_size, sigma):
    """T[i, k] = g[k - i + ws//2] inside the band -> zero-padded 'same' 1-D conv.
    The Gaussian is symmetric, so T works for both the row (left) and column
    (right) passes."""
    half = window_size // 2
    xs = jnp.arange(window_size, dtype=jnp.float32)
    g = jnp.exp(-jnp.square(xs - half) / (2.0 * sigma * sigma))
    g = g / jnp.sum(g)
    i = jnp.arange(n)[:, None]
    k = jnp.arange(n)[None, :]
    d = k - i + half
    valid = (d >= 0) & (d < window_size)
    t = jnp.where(valid, jnp.take(g, jnp.clip(d, 0, window_size - 1)), 0.0)
    return t.astype(jnp.float32)


# ----------------------------- fused Pallas kernel -----------------------------

def _ssim_sum_kernel(x1_ref, x2_ref, th_ref, tw_ref, o_ref, z2_ref, acc_ref,
                     *, g, pw, c1, c2, inv_count, sum_adjust):
    step = pl.program_id(0)

    @pl.when(step == 0)
    def _init():
        acc_ref[...] = jnp.zeros_like(acc_ref)

    x1 = x1_ref[...]               # (H, g*PW) f32, lane-dense (PW multiple of 128)
    x2 = x2_ref[...]
    th = th_ref[...]               # (H, H)   Gaussian band matrix (rows)
    tw = tw_ref[...]               # (PW, PW) block-diagonal Gaussian band (cols)
    hh = x1.shape[0]

    # Stack the five conv inputs along lanes -> one row-pass matmul.
    # TODO(synk): bf16 matmul operands would be faster on all generations but may
    # break the 1e-4 tolerance via the E[x^2]-mu^2 cancellation; kept f32.
    slab = jnp.concatenate([x1, x2, x1 * x1, x2 * x2, x1 * x2], axis=1)  # (H, 5*g*PW)

    # Row pass: ONE (H,H) @ (H, 5*g*PW) MXU matmul.
    y = jnp.dot(th, slab, preferred_element_type=jnp.float32)

    # Re-tile lane chunks into rows (aligned VMEM copies only) so the column pass
    # is ONE (5*g*H, PW) @ (PW, PW) MXU matmul.
    for cidx in range(5 * g):
        z2_ref[cidx * hh:(cidx + 1) * hh, :] = y[:, cidx * pw:(cidx + 1) * pw]
    r = jnp.dot(z2_ref[...], tw, preferred_element_type=jnp.float32)     # (5*g*H, PW)

    gh = g * hh
    mu1 = r[0 * gh:1 * gh, :]
    mu2 = r[1 * gh:2 * gh, :]
    e11 = r[2 * gh:3 * gh, :]
    e22 = r[3 * gh:4 * gh, :]
    e12 = r[4 * gh:5 * gh, :]

    mu1_sq = mu1 * mu1
    mu2_sq = mu2 * mu2
    mu1_mu2 = mu1 * mu2
    sigma1_sq = e11 - mu1_sq
    sigma2_sq = e22 - mu2_sq
    sigma12 = e12 - mu1_mu2

    num = (2.0 * mu1_mu2 + c1) * (2.0 * sigma12 + c2)
    den = (mu1_sq + mu2_sq + c1) * (sigma1_sq + sigma2_sq + c2)
    smap = num * pl.reciprocal(den, approx=False)

    # Sublane/lane-preserving partial sums (pure VPU adds); the one cross-lane
    # reduction happens only in the finalize branch.
    if gh % 8 == 0:
        acc_ref[...] += smap.reshape(gh // 8, 8, pw).sum(axis=0)
    else:
        acc_ref[0:1, :] += jnp.sum(smap, axis=0, keepdims=True)

    @pl.when(step == pl.num_programs(0) - 1)
    def _finalize():
        total = jnp.sum(acc_ref[...])
        o_ref[...] = jnp.zeros_like(o_ref) + (total - sum_adjust) * inv_count


# ----------------------------------- wrapper -----------------------------------

def _vmem_capacity_bytes():
    try:
        return int(pltpu.get_tpu_info().vmem_capacity_bytes)
    except Exception:
        return 64 << 20            # conservative default (v7x per-TensorCore)


def ssim(img1, img2, window_size=11, sigma=1.5, size_average=True):
    """SSIM matching the PyTorch module's forward (window is stateless here)."""
    # TODO(synk): size_average=False (per-image mean) is not wired through the kernel.
    assert size_average, "only size_average=True is implemented"
    assert img1.shape == img2.shape and img1.ndim == 4
    n, c, h, w = img1.shape
    nplanes = n * c

    # Lane packing factor: put P planes side-by-side along the last dim so vregs,
    # VPU math and the MXU N dimension are >= 128 lanes wide even for small W.
    if w % 128 == 0:
        p = 1
    elif 128 % w == 0:
        p = 128 // w
    else:
        p = 1                      # TODO(synk): generic W needs in-plane lane padding
    pw = p * w
    lane_aligned = (pw % 128 == 0)

    ngroups_min = int(pl.cdiv(nplanes, p))

    # Generation-aware sizing (v5e/v6e: 128 MiB VMEM, v7x: 64 MiB per TensorCore).
    vmem_cap = _vmem_capacity_bytes()
    per_group_bytes = 40 * h * pw * 4            # ~all live f32 per packed group
    tile_budget = max(4 << 20, int(0.40 * vmem_cap))
    if lane_aligned:
        g_tile = int(max(1, min(ngroups_min, tile_budget // per_group_bytes, 64)))
    else:
        g_tile = ngroups_min       # single block: block last dim must equal full extent
    n_steps = int(pl.cdiv(ngroups_min, g_tile))
    ngroups = n_steps * g_tile
    total_planes = ngroups * p
    pad_planes = total_planes - nplanes

    x1 = img1.reshape(nplanes, h, w).astype(jnp.float32)
    x2 = img2.reshape(nplanes, h, w).astype(jnp.float32)
    if pad_planes:
        # Zero padded planes contribute exactly 1.0 per pixel to the SSIM map;
        # that contribution is subtracted again in finalize (sum_adjust).
        zpad = jnp.zeros((pad_planes, h, w), jnp.float32)
        x1 = jnp.concatenate([x1, zpad], axis=0)
        x2 = jnp.concatenate([x2, zpad], axis=0)

    # (total_planes, H, W) -> (H, ngroups * P * W): groups/planes along lanes.
    def pack(x):
        return x.reshape(ngroups, p, h, w).transpose(2, 0, 1, 3).reshape(h, ngroups * pw)

    x1p, x2p = pack(x1), pack(x2)

    t_h = _gauss_band_matrix(h, window_size, sigma)
    t_w = _gauss_band_matrix(w, window_size, sigma)
    t_wb = t_w if p == 1 else jnp.kron(jnp.eye(p, dtype=jnp.float32), t_w)

    inv_count = 1.0 / float(nplanes * h * w)
    sum_adjust = float(pad_planes * h * w)

    vmem_need = per_group_bytes * g_tile + 2 * (h * h + pw * pw) * 4 + (8 << 20)
    vmem_limit = int(min(max(vmem_need, 24 << 20), int(0.7 * vmem_cap)))

    kern = functools.partial(_ssim_sum_kernel, g=g_tile, pw=pw, c1=_C1, c2=_C2,
                             inv_count=inv_count, sum_adjust=sum_adjust)
    out = pl.pallas_call(
        kern,
        out_shape=jax.ShapeDtypeStruct((1, 1), jnp.float32),
        grid_spec=pltpu.PrefetchScalarGridSpec(
            num_scalar_prefetch=0,
            grid=(n_steps,),
            in_specs=[
                pl.BlockSpec((h, g_tile * pw), lambda i: (0, i)),
                pl.BlockSpec((h, g_tile * pw), lambda i: (0, i)),
                pl.BlockSpec((h, h), lambda i: (0, 0)),
                pl.BlockSpec((pw, pw), lambda i: (0, 0)),
            ],
            out_specs=pl.BlockSpec((1, 1), lambda i: (0, 0)),
            scratch_shapes=[
                pltpu.VMEM((5 * g_tile * h, pw), jnp.float32),   # re-tiled conv input
                pltpu.VMEM((8, pw), jnp.float32),                # partial-sum accumulator
            ],
        ),
        compiler_params=pltpu.CompilerParams(
            # Single resident accumulator across the plane-group axis -> "arbitrary".
            # TODO(synk): v7x 2-TensorCore split (parallel leading axis, per-core
            # partial sums) and banded/halo tiling for large H/W not implemented.
            dimension_semantics=("arbitrary",),
            vmem_limit_bytes=vmem_limit,
        ),
    )(x1p, x2p, t_h, t_wb)
    return out[0, 0]


# ------------------------- pure-JAX reference (for check) -------------------------

def _ssim_reference(img1, img2, window_size=11, sigma=1.5):
    n, c, h, w = img1.shape
    half = window_size // 2
    xs = jnp.arange(window_size, dtype=jnp.float32)
    g = jnp.exp(-jnp.square(xs - half) / (2.0 * sigma * sigma))
    g = g / jnp.sum(g)
    w2d = jnp.outer(g, g)
    win = jnp.broadcast_to(w2d, (c, 1, window_size, window_size))

    def conv(x):
        return jax.lax.conv_general_dilated(
            x.astype(jnp.float32), win, window_strides=(1, 1),
            padding=[(half, half), (half, half)],
            dimension_numbers=("NCHW", "OIHW", "NCHW"),
            feature_group_count=c)

    mu1, mu2 = conv(img1), conv(img2)
    mu1_sq, mu2_sq, mu1_mu2 = mu1 * mu1, mu2 * mu2, mu1 * mu2
    s1 = conv(img1 * img1) - mu1_sq
    s2 = conv(img2 * img2) - mu2_sq
    s12 = conv(img1 * img2) - mu1_mu2
    smap = ((2 * mu1_mu2 + _C1) * (2 * s12 + _C2)) / (
        (mu1_sq + mu2_sq + _C1) * (s1 + s2 + _C2))
    return jnp.mean(smap)


if __name__ == "__main__":
    key = jax.random.PRNGKey(0)
    k1, k2 = jax.random.split(key)
    img1 = jax.random.normal(k1, (2, 4, 16, 16), jnp.float32)
    img2 = img1 + 0.1 * jax.random.normal(k2, (2, 4, 16, 16), jnp.float32)

    fwd = jax.jit(ssim)
    out = jax.block_until_ready(fwd(img1, img2))
    ref = jax.block_until_ready(_ssim_reference(img1, img2))

    assert out.shape == (), out.shape
    assert bool(jnp.isfinite(out))
    assert bool(jnp.abs(out - ref) < 1e-4), (float(out), float(ref))
    print("KERNEL_OK")
</pallas_src>

<mosaic_0001>
module attributes {stable_mosaic.version = 11 : i64} {
  func.func @_ssim_sum_kernel(%arg0: i32, %arg1: memref<16x128xf32, #tpu.memory_space<vmem>>, %arg2: memref<16x128xf32, #tpu.memory_space<vmem>>, %arg3: memref<16x16xf32, #tpu.memory_space<vmem>>, %arg4: memref<128x128xf32, #tpu.memory_space<vmem>>, %arg5: memref<1x1xf32, #tpu.memory_space<vmem>>, %arg6: memref<80x128xf32, #tpu.memory_space<vmem>>, %arg7: memref<8x128xf32, #tpu.memory_space<vmem>>) attributes {dimension_semantics = [#tpu.dimension_semantics<arbitrary>], iteration_bounds = array<i64: 1>, scalar_prefetch = 0 : i64, scratch_operands = 2 : i64, tpu.core_type = #tpu.core_type<tc>, window_params = [{transform_indices = @transform_0, window_bounds = array<i64: 16, 128>}, {transform_indices = @transform_1, window_bounds = array<i64: 16, 128>}, {pipeline_mode = #tpu.pipeline_mode<synchronous>, transform_indices = @transform_2, window_bounds = array<i64: 16, 16>}, {pipeline_mode = #tpu.pipeline_mode<synchronous>, transform_indices = @transform_3, window_bounds = array<i64: 128, 128>}, {pipeline_mode = #tpu.pipeline_mode<synchronous>, transform_indices = @transform_4, window_bounds = array<i64: 1, 1>}]} {
    %c0_i32 = arith.constant 0 : i32
    %0 = arith.cmpi eq, %arg0, %c0_i32 : i32
    %1 = arith.extui %0 : i1 to i32
    %c0_i32_0 = arith.constant 0 : i32
    %2 = arith.cmpi ne, %1, %c0_i32_0 : i32
    scf.if %2 {
      %cst_30 = arith.constant 0.000000e+00 : f32
      %61 = vector.broadcast %cst_30 : f32 to vector<8x128xf32>
      %c0_31 = arith.constant 0 : index
      %c0_32 = arith.constant 0 : index
      %62 = vector.load %arg7[%c0_31, %c0_32] : memref<8x128xf32, #tpu.memory_space<vmem>>, vector<8x128xf32>
      tpu.vector_store %arg7[%c0_31, %c0_32], %61 {strides = array<i32>} : memref<8x128xf32, #tpu.memory_space<vmem>>, vector<8x128xf32>,
    } else {
    }
    %c0 = arith.constant 0 : index
    %c0_1 = arith.constant 0 : index
    %3 = vector.load %arg1[%c0, %c0_1] : memref<16x128xf32, #tpu.memory_space<vmem>>, vector<16x128xf32>
    %c0_2 = arith.constant 0 : index
    %c0_3 = arith.constant 0 : index
    %4 = vector.load %arg2[%c0_2, %c0_3] : memref<16x128xf32, #tpu.memory_space<vmem>>, vector<16x128xf32>
    %c0_4 = arith.constant 0 : index
    %c0_5 = arith.constant 0 : index
    %5 = vector.load %arg3[%c0_4, %c0_5] : memref<16x16xf32, #tpu.memory_space<vmem>>, vector<16x16xf32>
    %c0_6 = arith.constant 0 : index
    %c0_7 = arith.constant 0 : index
    %6 = vector.load %arg4[%c0_6, %c0_7] : memref<128x128xf32, #tpu.memory_space<vmem>>, vector<128x128xf32>
    %7 = arith.mulf %3, %3 : vector<16x128xf32>
    %8 = arith.mulf %4, %4 : vector<16x128xf32>
    %9 = arith.mulf %3, %4 : vector<16x128xf32>
    %10 = tpu.concatenate %3, %4, %7, %8, %9 in 1 : vector<16x128xf32>, vector<16x128xf32>, vector<16x128xf32>, vector<16x128xf32>, vector<16x128xf32> -> vector<16x640xf32>
    %cst = arith.constant dense<0.000000e+00> : vector<16x640xf32>
    %11 = tpu.matmul %5, %10, %cst {dimension_numbers = #tpu.dot_dimension_numbers<[1], [0], [0], [1], [0, 0, 1, 1], [], []>} : vector<16x16xf32>, vector<16x640xf32>, vector<16x640xf32> -> vector<16x640xf32>
    %12 = vector.extract_strided_slice %11 {offsets = [0, 0], sizes = [16, 128], strides = [1, 1]} : vector<16x640xf32> to vector<16x128xf32>
    %c0_8 = arith.constant 0 : index
    %c0_9 = arith.constant 0 : index
    %13 = vector.load %arg6[%c0_8, %c0_9] : memref<80x128xf32, #tpu.memory_space<vmem>>, vector<16x128xf32>
    tpu.vector_store %arg6[%c0_8, %c0_9], %12 {strides = array<i32>} : memref<80x128xf32, #tpu.memory_space<vmem>>, vector<16x128xf32>,
    %14 = vector.extract_strided_slice %11 {offsets = [0, 128], sizes = [16, 128], strides = [1, 1]} : vector<16x640xf32> to vector<16x128xf32>
    %c16 = arith.constant 16 : index
    %c0_10 = arith.constant 0 : index
    %15 = vector.load %arg6[%c16, %c0_10] : memref<80x128xf32, #tpu.memory_space<vmem>>, vector<16x128xf32>
    tpu.vector_store %arg6[%c16, %c0_10], %14 {strides = array<i32>} : memref<80x128xf32, #tpu.memory_space<vmem>>, vector<16x128xf32>,
    %16 = vector.extract_strided_slice %11 {offsets = [0, 256], sizes = [16, 128], strides = [1, 1]} : vector<16x640xf32> to vector<16x128xf32>
    %c32 = arith.constant 32 : index
    %c0_11 = arith.constant 0 : index
    %17 = vector.load %arg6[%c32, %c0_11] : memref<80x128xf32, #tpu.memory_space<vmem>>, vector<16x128xf32>
    tpu.vector_store %arg6[%c32, %c0_11], %16 {strides = array<i32>} : memref<80x128xf32, #tpu.memory_space<vmem>>, vector<16x128xf32>,
    %18 = vector.extract_strided_slice %11 {offsets = [0, 384], sizes = [16, 128], strides = [1, 1]} : vector<16x640xf32> to vector<16x128xf32>
    %c48 = arith.constant 48 : index
    %c0_12 = arith.constant 0 : index
    %19 = vector.load %arg6[%c48, %c0_12] : memref<80x128xf32, #tpu.memory_space<vmem>>, vector<16x128xf32>
    tpu.vector_store %arg6[%c48, %c0_12], %18 {strides = array<i32>} : memref<80x128xf32, #tpu.memory_space<vmem>>, vector<16x128xf32>,
    %20 = vector.extract_strided_slice %11 {offsets = [0, 512], sizes = [16, 128], strides = [1, 1]} : vector<16x640xf32> to vector<16x128xf32>
    %c64 = arith.constant 64 : index
    %c0_13 = arith.constant 0 : index
    %21 = vector.load %arg6[%c64, %c0_13] : memref<80x128xf32, #tpu.memory_space<vmem>>, vector<16x128xf32>
    tpu.vector_store %arg6[%c64, %c0_13], %20 {strides = array<i32>} : memref<80x128xf32, #tpu.memory_space<vmem>>, vector<16x128xf32>,
    %c0_14 = arith.constant 0 : index
    %c0_15 = arith.constant 0 : index
    %22 = vector.load %arg6[%c0_14, %c0_15] : memref<80x128xf32, #tpu.memory_space<vmem>>, vector<80x128xf32>
    %cst_16 = arith.constant dense<0.000000e+00> : vector<80x128xf32>
    %23 = tpu.matmul %22, %6, %cst_16 {dimension_numbers = #tpu.dot_dimension_numbers<[1], [0], [0], [1], [0, 0, 1, 1], [], []>} : vector<80x128xf32>, vector<128x128xf32>, vector<80x128xf32> -> vector<80x128xf32>
    %24 = vector.extract_strided_slice %23 {offsets = [0, 0], sizes = [16, 128], strides = [1, 1]} : vector<80x128xf32> to vector<16x128xf32>
    %25 = vector.extract_strided_slice %23 {offsets = [16, 0], sizes = [16, 128], strides = [1, 1]} : vector<80x128xf32> to vector<16x128xf32>
    %26 = vector.extract_strided_slice %23 {offsets = [32, 0], sizes = [16, 128], strides = [1, 1]} : vector<80x128xf32> to vector<16x128xf32>
    %27 = vector.extract_strided_slice %23 {offsets = [48, 0], sizes = [16, 128], strides = [1, 1]} : vector<80x128xf32> to vector<16x128xf32>
    %28 = vector.extract_strided_slice %23 {offsets = [64, 0], sizes = [16, 128], strides = [1, 1]} : vector<80x128xf32> to vector<16x128xf32>
    %29 = arith.mulf %24, %24 : vector<16x128xf32>
    %30 = arith.mulf %25, %25 : vector<16x128xf32>
    %31 = arith.mulf %24, %25 : vector<16x128xf32>
    %32 = arith.subf %26, %29 : vector<16x128xf32>
    %33 = arith.subf %27, %30 : vector<16x128xf32>
    %34 = arith.subf %28, %31 : vector<16x128xf32>
    %cst_17 = arith.constant 2.000000e+00 : f32
    %35 = vector.broadcast %cst_17 : f32 to vector<16x128xf32>
    %36 = arith.mulf %35, %31 : vector<16x128xf32>
    %cst_18 = arith.constant 9.99999974E-5 : f32
    %37 = vector.broadcast %cst_18 : f32 to vector<16x128xf32>
    %38 = arith.addf %36, %37 : vector<16x128xf32>
    %cst_19 = arith.constant 2.000000e+00 : f32
    %39 = vector.broadcast %cst_19 : f32 to vector<16x128xf32>
    %40 = arith.mulf %39, %34 : vector<16x128xf32>
    %cst_20 = arith.constant 8.99999984E-4 : f32
    %41 = vector.broadcast %cst_20 : f32 to vector<16x128xf32>
    %42 = arith.addf %40, %41 : vector<16x128xf32>
    %43 = arith.mulf %38, %42 : vector<16x128xf32>
    %44 = arith.addf %29, %30 : vector<16x128xf32>
    %cst_21 = arith.constant 9.99999974E-5 : f32
    %45 = vector.broadcast %cst_21 : f32 to vector<16x128xf32>
    %46 = arith.addf %44, %45 : vector<16x128xf32>
    %47 = arith.addf %32, %33 : vector<16x128xf32>
    %cst_22 = arith.constant 8.99999984E-4 : f32
    %48 = vector.broadcast %cst_22 : f32 to vector<16x128xf32>
    %49 = arith.addf %47, %48 : vector<16x128xf32>
    %50 = arith.mulf %46, %49 : vector<16x128xf32>
    %51 = tpu.reciprocal %50 : vector<16x128xf32> -> vector<16x128xf32>
    %52 = arith.mulf %43, %51 : vector<16x128xf32>
    %c0_23 = arith.constant 0 : index
    %c0_24 = arith.constant 0 : index
    %53 = vector.load %arg7[%c0_23, %c0_24] : memref<8x128xf32, #tpu.memory_space<vmem>>, vector<8x128xf32>
    %54 = vector.shape_cast %52 : vector<16x128xf32> to vector<2x8x128xf32>
    %cst_25 = arith.constant dense<0.000000e+00> : vector<8x128xf32>
    %55 = vector.multi_reduction <add>, %54, %cst_25 [0] : vector<2x8x128xf32> to vector<8x128xf32>
    %56 = arith.addf %53, %55 : vector<8x128xf32>
    %c0_26 = arith.constant 0 : index
    %c0_27 = arith.constant 0 : index
    %57 = vector.load %arg7[%c0_26, %c0_27] : memref<8x128xf32, #tpu.memory_space<vmem>>, vector<8x128xf32>
    tpu.vector_store %arg7[%c0_26, %c0_27], %56 {strides = array<i32>} : memref<8x128xf32, #tpu.memory_space<vmem>>, vector<8x128xf32>,
    %c0_i32_28 = arith.constant 0 : i32
    %58 = arith.cmpi eq, %arg0, %c0_i32_28 : i32
    %59 = arith.extui %58 : i1 to i32
    %c0_i32_29 = arith.constant 0 : i32
    %60 = arith.cmpi ne, %59, %c0_i32_29 : i32
    scf.if %60 {
      %c0_30 = arith.constant 0 : index
      %c0_31 = arith.constant 0 : index
      %61 = vector.load %arg7[%c0_30, %c0_31] : memref<8x128xf32, #tpu.memory_space<vmem>>, vector<8x128xf32>
      %62 = vector.shape_cast %61 : vector<8x128xf32> to vector<1x8x128xf32>
      %cst_32 = arith.constant dense<0.000000e+00> : vector<1xf32>
      %63 = vector.multi_reduction <add>, %62, %cst_32 [1, 2] : vector<1x8x128xf32> to vector<1xf32>
      %64 = vector.shape_cast %63 : vector<1xf32> to vector<1x1x1xf32>
      %65 = vector.extract %64[0, 0, 0] : f32 from vector<1x1x1xf32>
      %cst_33 = arith.constant 0.000000e+00 : f32
      %66 = vector.broadcast %cst_33 : f32 to vector<1x1xf32>
      %cst_34 = arith.constant 0.000000e+00 : f32
      %67 = arith.subf %65, %cst_34 : f32
      %cst_35 = arith.constant 4.8828125E-4 : f32
      %68 = arith.mulf %67, %cst_35 : f32
      %69 = vector.broadcast %68 : f32 to vector<1x1xf32>
      %70 = arith.addf %66, %69 : vector<1x1xf32>
      %c0_36 = arith.constant 0 : index
      %c0_37 = arith.constant 0 : index
      %71 = vector.load %arg5[%c0_36, %c0_37] : memref<1x1xf32, #tpu.memory_space<vmem>>, vector<1x1xf32>
      tpu.vector_store %arg5[%c0_36, %c0_37], %70 {strides = array<i32>} : memref<1x1xf32, #tpu.memory_space<vmem>>, vector<1x1xf32>,
    } else {
    }
    return
  }
  func.func @transform_0(%arg0: i32) -> (i32, i32) {
    %c0_i32 = arith.constant 0 : i32
    %c0_i32_0 = arith.constant 0 : i32
    return %c0_i32, %arg0 : i32, i32
  }
  func.func @transform_1(%arg0: i32) -> (i32, i32) {
    %c0_i32 = arith.constant 0 : i32
    %c0_i32_0 = arith.constant 0 : i32
    return %c0_i32, %arg0 : i32, i32
  }
  func.func @transform_2(%arg0: i32) -> (i32, i32) {
    %c0_i32 = arith.constant 0 : i32
    %c0_i32_0 = arith.constant 0 : i32
    %c0_i32_1 = arith.constant 0 : i32
    return %c0_i32, %c0_i32_0 : i32, i32
  }
  func.func @transform_3(%arg0: i32) -> (i32, i32) {
    %c0_i32 = arith.constant 0 : i32
    %c0_i32_0 = arith.constant 0 : i32
    %c0_i32_1 = arith.constant 0 : i32
    return %c0_i32, %c0_i32_0 : i32, i32
  }
  func.func @transform_4(%arg0: i32) -> (i32, i32) {
    %c0_i32 = arith.constant 0 : i32
    %c0_i32_0 = arith.constant 0 : i32
    %c0_i32_1 = arith.constant 0 : i32
    return %c0_i32, %c0_i32_0 : i32, i32
  }
}

</mosaic_0001>

<llo_original>
// kernel: ssim.1
$region0: #{ssim.1}
  #allocation0 [shape = 'u32[]', space=smem, size = 0x4, offset = 0x4, fixed_abs, tag = 'smem constant byte address 0x4 - core index']
  #allocation1 [shape = 'u32[144,128]{1,0:T(1,128)}', space=vmem, size = 0x12000, scoped, tag = 'internal scratch']
  #allocation2 [shape = 'f32[80,128]{1,0:T(8,128)}', space=vmem, size = 0xa000, scoped, tag = 'scratch operand']
  #allocation3 [shape = 'f32[8,128]{1,0:T(8,128)}', space=vmem, size = 0x1000, scoped, tag = 'scratch operand']
  %s0 = inlined_call_operand.vmem [shape: f32[16,128], index: 0, kind: input, shape index: {}]
  %s1 = inlined_call_operand.vmem [shape: f32[16,128], index: 1, kind: input, shape index: {}]
  %s2 = inlined_call_operand.vmem [shape: f32[16,16], index: 2, kind: input, shape index: {}]
  %s3 = inlined_call_operand.vmem [shape: f32[128,128], index: 3, kind: input, shape index: {}]
  %s4 = inlined_call_operand.hbm [shape: f32[1,1], index: 4, kind: output, shape index: {}]
  %s5 = sld [smem:[#allocation0]]
  $region34: #{ssim.1} parent=0
    _
  %s7 = ssub.s32 1, %s5
  %s8 = scalar_select 0, %s7, %s5
  $region1: #{ssim.1} parent=0
    #allocation4 [shape = 'u8[512]{0}', space=vmem, size = 0x400, scoped, tag = 'output window, operand 0, single buffered']
    #allocation5 [shape = 's32[1]{0}', space=sflag, size = 0x4, scoped, tag = 'scoped memory for ssim.1']
    %9 = vsyncpa [#allocation5], 0
    // Predicated region
    $region2: #{ssim.1} parent=1 // pred_check
      _
    $region3: #{ssim.1} parent=1 // pred_check_branch
      %11 = sbr.rel (0) target = $region5
    $region4: #{ssim.1} parent=1 // pred_region
      _
    $region5: #{ssim.1} parent=1 // pred_fallthru
      _
    // Predicated region
    $region6: #{ssim.1} parent=1 // pred_check
      _
    $region7: #{ssim.1} parent=1 // pred_check_branch
      %13 = sbr.rel (0) target = $region9
    $region8: #{ssim.1} parent=1 // pred_region
      _
    $region9: #{ssim.1} parent=1 // pred_fallthru
      _
    // Predicated region
    $region10: #{ssim.1} parent=1 // pred_check
      _
    $region11: #{ssim.1} parent=1 // pred_check_branch
      %15 = sbr.rel (0) target = $region13
    $region12: #{ssim.1} parent=1 // pred_region
      _
    $region13: #{ssim.1} parent=1 // pred_fallthru
      _
    // Predicated region
    $region14: #{ssim.1} parent=1 // pred_check
      _
    $region15: #{ssim.1} parent=1 // pred_check_branch
      %17 = sbr.rel (0) target = $region17
    $region16: #{ssim.1} parent=1 // pred_region
      _
    $region17: #{ssim.1} parent=1 // pred_fallthru
      _
    %p18 = scmp.eq.s32.totalorder 0, 0
    // Predicated region
    $region18: #{ssim.1} parent=1 // pred_check
      %p19 = pneg %p18
    $region19: #{ssim.1} parent=1 // pred_check_branch
      %21 = sbr.rel (%p19) target = $region21
    $region20: #{ssim.1} parent=1 // pred_region
      %22 = vst [vmem:[#allocation3] sm:$0xff] 0.0
    $region21: #{ssim.1} parent=1 // pred_fallthru
      _
    %v23 = vld [vmem:[%s0] sm:$0xff]
    %v24 = vld [vmem:[%s0 + $0x8] sm:$0xff]
    %v25 = vld [vmem:[%s1] sm:$0xff]
    %v26 = vld [vmem:[%s1 + $0x8] sm:$0xff]
    %v27 = vld [vmem:[%s2] sm:$0xff]
    %v28 = vld [vmem:[%s2 + $0x8] sm:$0xff]
    %v29 = vld [vmem:[%s3] sm:$0xff]
    %v30 = vld [vmem:[%s3 + $0x8] sm:$0xff]
    %v31 = vld [vmem:[%s3 + $0x10] sm:$0xff]
    %v32 = vld [vmem:[%s3 + $0x18] sm:$0xff]
    %v33 = vld [vmem:[%s3 + $0x20] sm:$0xff]
    %v34 = vld [vmem:[%s3 + $0x28] sm:$0xff]
    %v35 = vld [vmem:[%s3 + $0x30] sm:$0xff]
    %v36 = vld [vmem:[%s3 + $0x38] sm:$0xff]
    %v37 = vld [vmem:[%s3 + $0x40] sm:$0xff]
    %v38 = vld [vmem:[%s3 + $0x48] sm:$0xff]
    %v39 = vld [vmem:[%s3 + $0x50] sm:$0xff]
    %v40 = vld [vmem:[%s3 + $0x58] sm:$0xff]
    %v41 = vld [vmem:[%s3 + $0x60] sm:$0xff]
    %v42 = vld [vmem:[%s3 + $0x68] sm:$0xff]
    %v43 = vld [vmem:[%s3 + $0x70] sm:$0xff]
    %v44 = vld [vmem:[%s3 + $0x78] sm:$0xff]
    %v45 = vmul.f32 %v23, %v23
    %v46 = vmul.f32 %v24, %v24
    %v47 = vmul.f32 %v25, %v25
    %v48 = vmul.f32 %v26, %v26
    %v49 = vmul.f32 %v23, %v25
    %v50 = vmul.f32 %v24, %v26
    %vm51 = vcmask 130048
    %v53 = vsel %vm51, %v27, 0
    %v56 = vsel %vm51, %v28, 0
    %58 = vmatprep.subr.mxu0 0.0
    %59 = vmatpush1.msra.mxu0 0.0
    %60 = vmatprep.subr.mxu0 0.0
    %61 = vmatpush1.msra.mxu0 0.0
    %62 = vmatprep.subr.mxu0 0.0
    %63 = vmatpush1.msra.mxu0 0.0
    %64 = vmatprep.subr.mxu0 0.0
    %65 = vmatpush1.msra.mxu0 0.0
    %66 = vmatprep.subr.mxu0 0.0
    %67 = vmatpush1.msra.mxu0 0.0
    %68 = vmatprep.subr.mxu0 0.0
    %69 = vmatpush1.msra.mxu0 0.0
    %70 = vmatprep.subr.mxu0 0.0
    %71 = vmatpush1.msra.mxu0 0.0
    %72 = vmatprep.subr.mxu0 0.0
    %73 = vmatpush1.msra.mxu0 0.0
    %74 = vmatprep.subr.mxu0 0.0
    %75 = vmatpush1.msra.mxu0 0.0
    %76 = vmatprep.subr.mxu0 0.0
    %77 = vmatpush1.msra.mxu0 0.0
    %78 = vmatprep.subr.mxu0 0.0
    %79 = vmatpush1.msra.mxu0 0.0
    %80 = vmatprep.subr.mxu0 0.0
    %81 = vmatpush1.msra.mxu0 0.0
    %82 = vmatprep.subr.mxu0 0.0
    %83 = vmatpush1.msra.mxu0 0.0
    %84 = vmatprep.subr.mxu0 0.0
    %85 = vmatpush1.msra.mxu0 0.0
    %86 = vmatprep.subr.mxu0 %v26
    %87 = vmatpush1.msra.mxu0 %v24
    %88 = vmatprep.subr.mxu0 %v25
    %89 = vmatpush1.msra.mxu0 %v23
    %90 = vmatprep.subr.mxu0 0.0
    %91 = vmatpush2.msra.mxu0 0.0
    %92 = vmatprep.subr.mxu0 0.0
    %93 = vmatpush2.msra.mxu0 0.0
    %94 = vmatprep.subr.mxu0 0.0
    %95 = vmatpush2.msra.mxu0 0.0
    %96 = vmatprep.subr.mxu0 0.0
    %97 = vmatpush2.msra.mxu0 0.0
    %98 = vmatprep.subr.mxu0 0.0
    %99 = vmatpush2.msra.mxu0 0.0
    %100 = vmatprep.subr.mxu0 0.0
    %101 = vmatpush2.msra.mxu0 0.0
    %102 = vmatprep.subr.mxu0 0.0
    %103 = vmatpush2.msra.mxu0 0.0
    %104 = vmatprep.subr.mxu0 0.0
    %105 = vmatpush2.msra.mxu0 0.0
    %106 = vmatprep.subr.mxu0 0.0
    %107 = vmatpush2.msra.mxu0 0.0
    %108 = vmatprep.subr.mxu0 0.0
    %109 = vmatpush2.msra.mxu0 0.0
    %110 = vmatprep.subr.mxu0 0.0
    %111 = vmatpush2.msra.mxu0 0.0
    %112 = vmatprep.subr.mxu0 0.0
    %113 = vmatpush2.msra.mxu0 0.0
    %114 = vmatprep.subr.mxu0 0.0
    %115 = vmatpush2.msra.mxu0 0.0
    %116 = vmatprep.subr.mxu0 0.0
    %117 = vmatpush2.msra.mxu0 0.0
    %118 = vmatprep.subr.mxu0 0.0
    %119 = vmatpush2.msra.mxu0 0.0
    %120 = vmatprep.subr.mxu0 0.0
    %121 = vmatpush2.msra.mxu0 0.0
    %122 = vmatprep.mubr.f32.mxu0 0.0
    %123 = vmatmul.mubr.f32.gmra.mxu0 %v53
    %v124 = vpop.f32.mrf.mxu0
    %v125 = vadd.f32 0.0, %v124
    %v126 = vpop.f32.mrf.mxu0
    %v127 = vadd.f32 0.0, %v126
    %128 = vmatprep.mubr.f32.mxu0 0.0
    %129 = vmatmul.mubr.f32.gmra.mxu0 %v56
    %v130 = vpop.f32.mrf.mxu0
    %v131 = vadd.f32 0.0, %v130
    %v132 = vpop.f32.mrf.mxu0
    %v133 = vadd.f32 0.0, %v132
    %134 = vdwg.mxu0
    %135 = vmatprep.subr.mxu0 0.0
    %136 = vmatpush1.msra.mxu0 0.0
    %137 = vmatprep.subr.mxu0 0.0
    %138 = vmatpush1.msra.mxu0 0.0
    %139 = vmatprep.subr.mxu0 0.0
    %140 = vmatpush1.msra.mxu0 0.0
    %141 = vmatprep.subr.mxu0 0.0
    %142 = vmatpush1.msra.mxu0 0.0
    %143 = vmatprep.subr.mxu0 0.0
    %144 = vmatpush1.msra.mxu0 0.0
    %145 = vmatprep.subr.mxu0 0.0
    %146 = vmatpush1.msra.mxu0 0.0
    %147 = vmatprep.subr.mxu0 0.0
    %148 = vmatpush1.msra.mxu0 0.0
    %149 = vmatprep.subr.mxu0 0.0
    %150 = vmatpush1.msra.mxu0 0.0
    %151 = vmatprep.subr.mxu0 0.0
    %152 = vmatpush1.msra.mxu0 0.0
    %153 = vmatprep.subr.mxu0 0.0
    %154 = vmatpush1.msra.mxu0 0.0
    %155 = vmatprep.subr.mxu0 0.0
    %156 = vmatpush1.msra.mxu0 0.0
    %157 = vmatprep.subr.mxu0 0.0
    %158 = vmatpush1.msra.mxu0 0.0
    %159 = vmatprep.subr.mxu0 0.0
    %160 = vmatpush1.msra.mxu0 0.0
    %161 = vmatprep.subr.mxu0 0.0
    %162 = vmatpush1.msra.mxu0 0.0
    %163 = vmatprep.subr.mxu0 %v48
    %164 = vmatpush1.msra.mxu0 %v46
    %165 = vmatprep.subr.mxu0 %v47
    %166 = vmatpush1.msra.mxu0 %v45
    %167 = vmatprep.subr.mxu0 0.0
    %168 = vmatpush2.msra.mxu0 0.0
    %169 = vmatprep.subr.mxu0 0.0
    %170 = vmatpush2.msra.mxu0 0.0
    %171 = vmatprep.subr.mxu0 0.0
    %172 = vmatpush2.msra.mxu0 0.0
    %173 = vmatprep.subr.mxu0 0.0
    %174 = vmatpush2.msra.mxu0 0.0
    %175 = vmatprep.subr.mxu0 0.0
    %176 = vmatpush2.msra.mxu0 0.0
    %177 = vmatprep.subr.mxu0 0.0
    %178 = vmatpush2.msra.mxu0 0.0
    %179 = vmatprep.subr.mxu0 0.0
    %180 = vmatpush2.msra.mxu0 0.0
    %181 = vmatprep.subr.mxu0 0.0
    %182 = vmatpush2.msra.mxu0 0.0
    %183 = vmatprep.subr.mxu0 0.0
    %184 = vmatpush2.msra.mxu0 0.0
    %185 = vmatprep.subr.mxu0 0.0
    %186 = vmatpush2.msra.mxu0 0.0
    %187 = vmatprep.subr.mxu0 0.0
    %188 = vmatpush2.msra.mxu0 0.0
    %189 = vmatprep.subr.mxu0 0.0
    %190 = vmatpush2.msra.mxu0 0.0
    %191 = vmatprep.subr.mxu0 0.0
    %192 = vmatpush2.msra.mxu0 0.0
    %193 = vmatprep.subr.mxu0 0.0
    %194 = vmatpush2.msra.mxu0 0.0
    %195 = vmatprep.subr.mxu0 0.0
    %196 = vmatpush2.msra.mxu0 0.0
    %197 = vmatprep.subr.mxu0 0.0
    %198 = vmatpush2.msra.mxu0 0.0
    %199 = vmatprep.mubr.f32.mxu0 0.0
    %200 = vmatmul.mubr.f32.gmra.mxu0 %v53
    %v201 = vpop.f32.mrf.mxu0
    %v202 = vadd.f32 0.0, %v201
    %v203 = vpop.f32.mrf.mxu0
    %v204 = vadd.f32 0.0, %v203
    %205 = vmatprep.mubr.f32.mxu0 0.0
    %206 = vmatmul.mubr.f32.gmra.mxu0 %v56
    %v207 = vpop.f32.mrf.mxu0
    %v208 = vadd.f32 0.0, %v207
    %v209 = vpop.f32.mrf.mxu0
    %v210 = vadd.f32 0.0, %v209
    %211 = vdwg.mxu0
    %212 = vmatprep.subr.mxu0 0.0
    %213 = vmatpush1.msra.mxu0 0.0
    %214 = vmatprep.subr.mxu0 0.0
    %215 = vmatpush1.msra.mxu0 0.0
    %216 = vmatprep.subr.mxu0 0.0
    %217 = vmatpush1.msra.mxu0 0.0
    %218 = vmatprep.subr.mxu0 0.0
    %219 = vmatpush1.msra.mxu0 0.0
    %220 = vmatprep.subr.mxu0 0.0
    %221 = vmatpush1.msra.mxu0 0.0
    %222 = vmatprep.subr.mxu0 0.0
    %223 = vmatpush1.msra.mxu0 0.0
    %224 = vmatprep.subr.mxu0 0.0
    %225 = vmatpush1.msra.mxu0 0.0
    %226 = vmatprep.subr.mxu0 0.0
    %227 = vmatpush1.msra.mxu0 0.0
    %228 = vmatprep.subr.mxu0 0.0
    %229 = vmatpush1.msra.mxu0 0.0
    %230 = vmatprep.subr.mxu0 0.0
    %231 = vmatpush1.msra.mxu0 0.0
    %232 = vmatprep.subr.mxu0 0.0
    %233 = vmatpush1.msra.mxu0 0.0
    %234 = vmatprep.subr.mxu0 0.0
    %235 = vmatpush1.msra.mxu0 0.0
    %236 = vmatprep.subr.mxu0 0.0
    %237 = vmatpush1.msra.mxu0 0.0
    %238 = vmatprep.subr.mxu0 0.0
    %239 = vmatpush1.msra.mxu0 0.0
    %240 = vmatprep.subr.mxu0 0.0
    %241 = vmatpush1.msra.mxu0 %v50
    %242 = vmatprep.subr.mxu0 0.0
    %243 = vmatpush1.msra.mxu0 %v49
    %244 = vmatprep.subr.mxu0 0.0
    %245 = vmatpush2.msra.mxu0 0.0
    %246 = vmatprep.subr.mxu0 0.0
    %247 = vmatpush2.msra.mxu0 0.0
    %248 = vmatprep.subr.mxu0 0.0
    %249 = vmatpush2.msra.mxu0 0.0
    %250 = vmatprep.subr.mxu0 0.0
    %251 = vmatpush2.msra.mxu0 0.0
    %252 = vmatprep.subr.mxu0 0.0
    %253 = vmatpush2.msra.mxu0 0.0
    %254 = vmatprep.subr.mxu0 0.0
    %255 = vmatpush2.msra.mxu0 0.0
    %256 = vmatprep.subr.mxu0 0.0
    %257 = vmatpush2.msra.mxu0 0.0
    %258 = vmatprep.subr.mxu0 0.0
    %259 = vmatpush2.msra.mxu0 0.0
    %260 = vmatprep.subr.mxu0 0.0
    %261 = vmatpush2.msra.mxu0 0.0
    %262 = vmatprep.subr.mxu0 0.0
    %263 = vmatpush2.msra.mxu0 0.0
    %264 = vmatprep.subr.mxu0 0.0
    %265 = vmatpush2.msra.mxu0 0.0
    %266 = vmatprep.subr.mxu0 0.0
    %267 = vmatpush2.msra.mxu0 0.0
    %268 = vmatprep.subr.mxu0 0.0
    %269 = vmatpush2.msra.mxu0 0.0
    %270 = vmatprep.subr.mxu0 0.0
    %271 = vmatpush2.msra.mxu0 0.0
    %272 = vmatprep.subr.mxu0 0.0
    %273 = vmatpush2.msra.mxu0 0.0
    %274 = vmatprep.subr.mxu0 0.0
    %275 = vmatpush2.msra.mxu0 0.0
    %276 = vmatprep.mubr.f32.mxu0 0.0
    %277 = vmatmul.mubr.f32.gmra.mxu0 %v53
    %v278 = vpop.f32.mrf.mxu0
    %v279 = vadd.f32 0.0, %v278
    %v280 = vpop.f32.mrf.mxu0
    %281 = vmatprep.mubr.f32.mxu0 0.0
    %282 = vmatmul.mubr.f32.gmra.mxu0 %v56
    %v283 = vpop.f32.mrf.mxu0
    %v284 = vadd.f32 0.0, %v283
    %v285 = vpop.f32.mrf.mxu0
    %286 = vdwg.mxu0
    %287 = vst [vmem:[#allocation2] sm:$0xff] %v125
    %288 = vst [vmem:[#allocation2 + $0x8] sm:$0xff] %v131
    %289 = vst [vmem:[#allocation2 + $0x10] sm:$0xff] %v127
    %290 = vst [vmem:[#allocation2 + $0x18] sm:$0xff] %v133
    %291 = vst [vmem:[#allocation2 + $0x20] sm:$0xff] %v202
    %292 = vst [vmem:[#allocation2 + $0x28] sm:$0xff] %v208
    %293 = vst [vmem:[#allocation2 + $0x30] sm:$0xff] %v204
    %294 = vst [vmem:[#allocation2 + $0x38] sm:$0xff] %v210
    %295 = vst [vmem:[#allocation2 + $0x40] sm:$0xff] %v279
    %296 = vst [vmem:[#allocation2 + $0x48] sm:$0xff] %v284
    %v297 = vld [vmem:[#allocation2] sm:$0xff]
    %v298 = vld [vmem:[#allocation2 + $0x8] sm:$0xff]
    %v299 = vld [vmem:[#allocation2 + $0x10] sm:$0xff]
    %v300 = vld [vmem:[#allocation2 + $0x18] sm:$0xff]
    %v301 = vld [vmem:[#allocation2 + $0x20] sm:$0xff]
    %v302 = vld [vmem:[#allocation2 + $0x28] sm:$0xff]
    %v303 = vld [vmem:[#allocation2 + $0x30] sm:$0xff]
    %v304 = vld [vmem:[#allocation2 + $0x38] sm:$0xff]
    %v305 = vld [vmem:[#allocation2 + $0x40] sm:$0xff]
    %v306 = vld [vmem:[#allocation2 + $0x48] sm:$0xff]
    %307 = vmatprep.subr.mxu0 0.0
    %308 = vmatpush1.msra.mxu0 %v44
    %309 = vmatprep.subr.mxu0 0.0
    %310 = vmatpush1.msra.mxu0 %v43
    %311 = vmatprep.subr.mxu0 0.0
    %312 = vmatpush1.msra.mxu0 %v42
    %313 = vmatprep.subr.mxu0 0.0
    %314 = vmatpush1.msra.mxu0 %v41
    %315 = vmatprep.subr.mxu0 0.0
    %316 = vmatpush1.msra.mxu0 %v40
    %317 = vmatprep.subr.mxu0 0.0
    %318 = vmatpush1.msra.mxu0 %v39
    %319 = vmatprep.subr.mxu0 0.0
    %320 = vmatpush1.msra.mxu0 %v38
    %321 = vmatprep.subr.mxu0 0.0
    %322 = vmatpush1.msra.mxu0 %v37
    %323 = vmatprep.subr.mxu0 0.0
    %324 = vmatpush1.msra.mxu0 %v36
    %325 = vmatprep.subr.mxu0 0.0
    %326 = vmatpush1.msra.mxu0 %v35
    %327 = vmatprep.subr.mxu0 0.0
    %328 = vmatpush1.msra.mxu0 %v34
    %329 = vmatprep.subr.mxu0 0.0
    %330 = vmatpush1.msra.mxu0 %v33
    %331 = vmatprep.subr.mxu0 0.0
    %332 = vmatpush1.msra.mxu0 %v32
    %333 = vmatprep.subr.mxu0 0.0
    %334 = vmatpush1.msra.mxu0 %v31
    %335 = vmatprep.subr.mxu0 0.0
    %336 = vmatpush1.msra.mxu0 %v30
    %337 = vmatprep.subr.mxu0 0.0
    %338 = vmatpush1.msra.mxu0 %v29
    %339 = vmatprep.subr.mxu0 0.0
    %340 = vmatpush2.msra.mxu0 0.0
    %341 = vmatprep.subr.mxu0 0.0
    %342 = vmatpush2.msra.mxu0 0.0
    %343 = vmatprep.subr.mxu0 0.0
    %344 = vmatpush2.msra.mxu0 0.0
    %345 = vmatprep.subr.mxu0 0.0
    %346 = vmatpush2.msra.mxu0 0.0
    %347 = vmatprep.subr.mxu0 0.0
    %348 = vmatpush2.msra.mxu0 0.0
    %349 = vmatprep.subr.mxu0 0.0
    %350 = vmatpush2.msra.mxu0 0.0
    %351 = vmatprep.subr.mxu0 0.0
    %352 = vmatpush2.msra.mxu0 0.0
    %353 = vmatprep.subr.mxu0 0.0
    %354 = vmatpush2.msra.mxu0 0.0
    %355 = vmatprep.subr.mxu0 0.0
    %356 = vmatpush2.msra.mxu0 0.0
    %357 = vmatprep.subr.mxu0 0.0
    %358 = vmatpush2.msra.mxu0 0.0
    %359 = vmatprep.subr.mxu0 0.0
    %360 = vmatpush2.msra.mxu0 0.0
    %361 = vmatprep.subr.mxu0 0.0
    %362 = vmatpush2.msra.mxu0 0.0
    %363 = vmatprep.subr.mxu0 0.0
    %364 = vmatpush2.msra.mxu0 0.0
    %365 = vmatprep.subr.mxu0 0.0
    %366 = vmatpush2.msra.mxu0 0.0
    %367 = vmatprep.subr.mxu0 0.0
    %368 = vmatpush2.msra.mxu0 0.0
    %369 = vmatprep.subr.mxu0 0.0
    %370 = vmatpush2.msra.mxu0 0.0
    %371 = vmatprep.mubr.f32.mxu0 0.0
    %372 = vmatmul.mubr.f32.gmra.mxu0 %v297
    %v373 = vpop.f32.mrf.mxu0
    %v374 = vadd.f32 0.0, %v373
    %v375 = vpop.f32.mrf.mxu0
    %376 = vmatprep.mubr.f32.mxu0 0.0
    %377 = vmatmul.mubr.f32.gmra.mxu0 %v298
    %v378 = vpop.f32.mrf.mxu0
    %v379 = vadd.f32 0.0, %v378
    %v380 = vpop.f32.mrf.mxu0
    %381 = vmatprep.mubr.f32.mxu0 0.0
    %382 = vmatmul.mubr.f32.gmra.mxu0 %v299
    %v383 = vpop.f32.mrf.mxu0
    %v384 = vadd.f32 0.0, %v383
    %v385 = vpop.f32.mrf.mxu0
    %386 = vmatprep.mubr.f32.mxu0 0.0
    %387 = vmatmul.mubr.f32.gmra.mxu0 %v300
    %v388 = vpop.f32.mrf.mxu0
    %v389 = vadd.f32 0.0, %v388
    %v390 = vpop.f32.mrf.mxu0
    %391 = vmatprep.mubr.f32.mxu0 0.0
    %392 = vmatmul.mubr.f32.gmra.mxu0 %v301
    %v393 = vpop.f32.mrf.mxu0
    %v394 = vadd.f32 0.0, %v393
    %v395 = vpop.f32.mrf.mxu0
    %396 = vmatprep.mubr.f32.mxu0 0.0
    %397 = vmatmul.mubr.f32.gmra.mxu0 %v302
    %v398 = vpop.f32.mrf.mxu0
    %v399 = vadd.f32 0.0, %v398
    %v400 = vpop.f32.mrf.mxu0
    %401 = vmatprep.mubr.f32.mxu0 0.0
    %402 = vmatmul.mubr.f32.gmra.mxu0 %v303
    %v403 = vpop.f32.mrf.mxu0
    %v404 = vadd.f32 0.0, %v403
    %v405 = vpop.f32.mrf.mxu0
    %406 = vmatprep.mubr.f32.mxu0 0.0
    %407 = vmatmul.mubr.f32.gmra.mxu0 %v304
    %v408 = vpop.f32.mrf.mxu0
    %v409 = vadd.f32 0.0, %v408
    %v410 = vpop.f32.mrf.mxu0
    %411 = vmatprep.mubr.f32.mxu0 0.0
    %412 = vmatmul.mubr.f32.gmra.mxu0 %v305
    %v413 = vpop.f32.mrf.mxu0
    %v414 = vadd.f32 0.0, %v413
    %v415 = vpop.f32.mrf.mxu0
    %416 = vmatprep.mubr.f32.mxu0 0.0
    %417 = vmatmul.mubr.f32.gmra.mxu0 %v306
    %v418 = vpop.f32.mrf.mxu0
    %v419 = vadd.f32 0.0, %v418
    %v420 = vpop.f32.mrf.mxu0
    %421 = vdwg.mxu0
    %v422 = vmul.f32 %v374, %v374
    %v423 = vmul.f32 %v379, %v379
    %v424 = vmul.f32 %v384, %v384
    %v425 = vmul.f32 %v389, %v389
    %v426 = vmul.f32 %v374, %v384
    %v427 = vmul.f32 %v379, %v389
    %v428 = vsub.f32 %v394, %v422
    %v429 = vsub.f32 %v399, %v423
    %v430 = vsub.f32 %v404, %v424
    %v431 = vsub.f32 %v409, %v425
    %v432 = vsub.f32 %v414, %v426
    %v433 = vsub.f32 %v419, %v427
    %v434 = vmul.f32 %v426, 2.0
    %v435 = vmul.f32 %v427, 2.0
    %v436 = vadd.f32 %v434, 0.0001
    %v437 = vadd.f32 %v435, 0.0001
    %v438 = vmul.f32 %v432, 2.0
    %v439 = vmul.f32 %v433, 2.0
    %v440 = vadd.f32 %v438, 0.0009
    %v441 = vadd.f32 %v439, 0.0009
    %v442 = vmul.f32 %v436, %v440
    %v443 = vmul.f32 %v437, %v441
    %v444 = vadd.f32 %v422, %v424
    %v445 = vadd.f32 %v423, %v425
    %v446 = vadd.f32 %v444, 0.0001
    %v447 = vadd.f32 %v445, 0.0001
    %v448 = vadd.f32 %v428, %v430
    %v449 = vadd.f32 %v429, %v431
    %v450 = vadd.f32 %v448, 0.0009
    %v451 = vadd.f32 %v449, 0.0009
    %v452 = vmul.f32 %v446, %v450
    %v453 = vmul.f32 %v447, %v451
    %v454 = vrcp.pop %v452
    %v455 = vrcp.pop %v453
    %v456 = vmul.f32 %v442, %v454
    %v457 = vmul.f32 %v443, %v455
    %v458 = vld [vmem:[#allocation3] sm:$0xff]
    %v459 = vadd.f32 %v456, %v457
    %v460 = vadd.f32 %v458, %v459
    %461 = vst [vmem:[#allocation3] sm:$0xff] %v460
    // Predicated region
    $region22: #{ssim.1} parent=1 // pred_check
      %p462 = pneg %p18
    $region23: #{ssim.1} parent=1 // pred_check_branch
      %464 = sbr.rel (%p462) target = $region25
    $region24: #{ssim.1} parent=1 // pred_region
      %v465 = vld [vmem:[#allocation3] sm:$0xff]
      %466 = vadd.xlane.f32.xlu0 %v465
      %v467 = vpop.xlane.xlu0 %466
      %v468 = vrot.slane %v467, 4
      %v469 = vadd.f32 %v467, %v468
      %v470 = vrot.slane %v469, 2
      %v471 = vadd.f32 %v469, %v470
      %v472 = vrot.slane %v471, 1
      %v473 = vadd.f32 %v471, %v472
      %s474 = vtos %v473
      %s475 = smul.f32 %s474, 0.00048828125
      %v476 = vstv %s475
      %v477 = vadd.f32 %v476, 0.0
      %vm478 = vcmask 0
      %479 = vst.msk [vmem:[#allocation4] sm:$0x1] %vm478, %v477
    $region25: #{ssim.1} parent=1 // pred_fallthru
      _
    // Predicated region
    $region26: #{ssim.1} parent=1 // pred_check
      _
    $region27: #{ssim.1} parent=1 // pred_check_branch
      %481 = sbr.rel (0) target = $region29
    $region28: #{ssim.1} parent=1 // pred_region
      %s483 = ssub.s32 16, 16
      %484 = vsyncadd [#allocation5], %s483
      %s486 = sshll.u32 [#allocation4], 4
      %s487 = int_to_ptr.vmem [resolvable:$true] %s486
      %489 = dma.vmem_to_hbm [thread:$0]  %s487, 16, %s4, [#allocation5]
    $region29: #{ssim.1} parent=1 // pred_fallthru
      _
    // Predicated region
    $region30: #{ssim.1} parent=1 // pred_check
      _
    $region31: #{ssim.1} parent=1 // pred_check_branch
      %491 = sbr.rel (0) target = $region33
    $region32: #{ssim.1} parent=1 // pred_region
      %492 = dma.done [#allocation5], 16
    $region33: #{ssim.1} parent=1 // pred_fallthru
      _
    %493 = vsyncpa [#allocation5], 1

</llo_original>
